<compile_context>
chip_gen: v6e
topology: v6e:2x2x1
jax: 0.10.0
libtpu: 0.0.40
codegen_flags: <defaults>
</compile_context>

<pallas_src>
import math

import jax
import jax.numpy as jnp
import numpy as np
from jax.experimental import pallas as pl
from jax.experimental.pallas import tpu as pltpu


def _decoder_kernel(x_ref, w_ref, grr_ref, gri_ref, gii_ref, ber_ref, bei_ref,
                    alpha_ref, out_ref):
    """Fused complex transposed-conv (block GEMM) + complex BN (train) + PReLU.

    x_ref   : (N, 2K, P)    im2col'd input, [real ; imag] stacked on the K axis
    w_ref   : (2Cout, 2K)   block-complex weight [[Wr, -Wi], [Wi, Wr]]
    g*/b*   : (Cout, P)     per-(C,H,W) BN params for this P tile
    alpha   : (1, 1) SMEM   PReLU slope
    out_ref : (N, 2Cout, P) NCHW-flat output, [real | imag] channel halves
    """
    n_batch = x_ref.shape[0]
    cout = grr_ref.shape[0]
    eps = 1e-5
    inv_n = 1.0 / n_batch

    w = w_ref[...]
    alpha = alpha_ref[0, 0]

    # ---- Pass 1: one MXU GEMM per batch element (real+imag and the full
    # contraction fused).  Pre-BN activations stay live in vregs (tiles are a
    # few KB); only the five batch-moment accumulators grow with the tile.
    # TODO(synk): for large batch sizes stash y in out_ref and re-load it in
    # pass 2 instead of keeping all N tiles live (register/VMEM pressure).
    ys = []
    s_r = s_i = s_rr = s_ii = s_ri = None
    for nb in range(n_batch):
        y = jnp.dot(w, x_ref[nb], preferred_element_type=jnp.float32)  # (2Cout, P)
        yr = y[0:cout]
        yi = y[cout:2 * cout]
        ys.append((yr, yi))
        if nb == 0:
            s_r, s_i = yr, yi
            s_rr, s_ii, s_ri = yr * yr, yi * yi, yr * yi
        else:
            s_r = s_r + yr
            s_i = s_i + yi
            s_rr = s_rr + yr * yr
            s_ii = s_ii + yi * yi
            s_ri = s_ri + yr * yi

    # ---- ComplexBatchNormal (training): per-(C,H,W) stats over the batch dim.
    mu_r = s_r * inv_n
    mu_i = s_i * inv_n
    vrr = s_rr * inv_n - mu_r * mu_r + eps
    vii = s_ii * inv_n - mu_i * mu_i + eps
    vri = s_ri * inv_n - mu_r * mu_i

    # Inverse matrix square-root of the 2x2 covariance (Trabelsi complex BN).
    tau = vrr + vii
    delta = vrr * vii - vri * vri
    s = jnp.sqrt(delta)
    inv_st = jax.lax.rsqrt(delta * (tau + 2.0 * s))  # 1/(sqrt(delta)*sqrt(tau+2s)), EUP
    w_rr = (vii + s) * inv_st
    w_ii = (vrr + s) * inv_st
    w_ri = -vri * inv_st

    # Fold gamma into the whitening matrix and beta/mean into additive
    # constants ONCE (outside the batch loop): pass 2 is 4 mul + 2 add + PReLU.
    g_rr = grr_ref[...]
    g_ri = gri_ref[...]
    g_ii = gii_ref[...]
    a_rr = g_rr * w_rr + g_ri * w_ri
    a_ri = g_rr * w_ri + g_ri * w_ii
    a_ir = g_ri * w_rr + g_ii * w_ri
    a_ii = g_ri * w_ri + g_ii * w_ii
    c_r = ber_ref[...] - a_rr * mu_r - a_ri * mu_i
    c_i = bei_ref[...] - a_ir * mu_r - a_ii * mu_i

    # ---- Pass 2: affine-normalize + PReLU; lane-dense stores (P on lanes).
    for nb in range(n_batch):
        yr, yi = ys[nb]
        zr = a_rr * yr + a_ri * yi + c_r
        zi = a_ir * yr + a_ii * yi + c_i
        out_ref[nb, 0:cout, :] = jnp.where(zr > 0.0, zr, alpha * zr)
        out_ref[nb, cout:2 * cout, :] = jnp.where(zi > 0.0, zi, alpha * zi)


def decoder_forward(x, params, kernel_size, stride, padding, *, tile_p=512):
    """x: (N, 2*Cin, H, W) float32 NCHW, channels ordered [real | imag]."""
    n, c2, h, w = x.shape
    cin = c2 // 2
    kh, kw = kernel_size
    sh, sw = stride
    ph, pw = padding
    cout = params["w_r"].shape[1]
    assert kh - 1 - ph >= 0 and kw - 1 - pw >= 0, "padding must be < kernel_size"

    ho = (h - 1) * sh - 2 * ph + kh
    wo = (w - 1) * sw - 2 * pw + kw
    hw = ho * wo
    k_dim = kh * kw * cin

    # split real/imag channel halves (stay NCHW)
    xr = x[:, :cin]
    xi = x[:, cin:]

    # transposed conv == correlation over a zero-dilated + padded input with a
    # spatially flipped, channel-swapped weight.
    def dilate_pad(z):                                    # (N, Cin, H, W)
        hd = (h - 1) * sh + 1
        wd = (w - 1) * sw + 1
        zd = jnp.zeros((n, cin, hd, wd), z.dtype).at[:, :, ::sh, ::sw].set(z)
        return jnp.pad(zd, ((0, 0), (0, 0), (kh - 1 - ph,) * 2, (kw - 1 - pw,) * 2))

    # TODO(synk): this wrapper-side im2col replicates the input kH*kW times
    # through HBM; for large shapes it could move on-chip as per-tap
    # accumulated matmuls over a VMEM-resident padded-input tile.
    def im2col_t(zp):                                     # (N, Cin, Hp, Wp) -> (N, K, P)
        taps = []
        for ih in range(kh):
            for iw in range(kw):
                taps.append(zp[:, :, ih:ih + ho, iw:iw + wo])   # (N, Cin, Ho, Wo)
        col = jnp.stack(taps, axis=1)                     # (N, kH*kW, Cin, Ho, Wo)
        return col.reshape(n, k_dim, hw)

    col = jnp.concatenate(
        [im2col_t(dilate_pad(xr)), im2col_t(dilate_pad(xi))], axis=1)   # (N, 2K, P)

    # torch ConvTranspose2d weight (Cin, Cout, kH, kW) -> GEMM (Cout, K),
    # K ordered (kH, kW, Cin) to match the im2col row order.
    def to_gemm_weight(w_t):
        w_eq = jnp.transpose(jnp.flip(w_t, axis=(2, 3)), (1, 2, 3, 0))  # (Cout,kH,kW,Cin)
        return w_eq.reshape(cout, k_dim)

    wr_g = to_gemm_weight(params["w_r"])
    wi_g = to_gemm_weight(params["w_i"])
    # block-complex weight: [xr ; xi] rows -> [real | imag] output rows
    w_blk = jnp.concatenate(
        [jnp.concatenate([wr_g, -wi_g], axis=1),
         jnp.concatenate([wi_g, wr_g], axis=1)], axis=0)                # (2Cout, 2K)
    # NOTE: conv-transpose bias (b_r/b_i) is constant over the batch, so the
    # training-mode BN centering removes it exactly -> intentionally dropped.

    g_rr = params["gamma_rr"].reshape(cout, hw)
    g_ri = params["gamma_ri"].reshape(cout, hw)
    g_ii = params["gamma_ii"].reshape(cout, hw)
    be_r = params["beta_r"].reshape(cout, hw)
    be_i = params["beta_i"].reshape(cout, hw)
    alpha = params["prelu_a"].reshape(1, 1).astype(jnp.float32)

    # 1-D grid over output pixels (lane axis).  BN stats are per-(C,H,W)
    # location, so P tiles are independent -> "parallel" (megacore-friendly).
    tp = hw if hw <= tile_p else tile_p                   # tile_p is 128-aligned
    grid_p = pl.cdiv(hw, tp)

    out = pl.pallas_call(
        _decoder_kernel,
        out_shape=jax.ShapeDtypeStruct((n, 2 * cout, hw), jnp.float32),
        grid=(grid_p,),
        in_specs=[
            pl.BlockSpec((n, 2 * k_dim, tp), lambda p: (0, 0, p)),      # col
            pl.BlockSpec((2 * cout, 2 * k_dim), lambda p: (0, 0)),      # W_blk
            pl.BlockSpec((cout, tp), lambda p: (0, p)),                 # gamma_rr
            pl.BlockSpec((cout, tp), lambda p: (0, p)),                 # gamma_ri
            pl.BlockSpec((cout, tp), lambda p: (0, p)),                 # gamma_ii
            pl.BlockSpec((cout, tp), lambda p: (0, p)),                 # beta_r
            pl.BlockSpec((cout, tp), lambda p: (0, p)),                 # beta_i
            pl.BlockSpec(memory_space=pltpu.MemorySpace.SMEM),          # alpha
        ],
        out_specs=pl.BlockSpec((n, 2 * cout, tp), lambda p: (0, 0, p)),
        compiler_params=pltpu.CompilerParams(
            dimension_semantics=("parallel",),
            vmem_limit_bytes=32 * 1024 * 1024,
        ),
    )(col, w_blk, g_rr, g_ri, g_ii, be_r, be_i, alpha)

    # (N, 2*Cout, P) -> NCHW (N, 2*Cout, Ho, Wo): a free reshape, no transpose.
    return out.reshape(n, 2 * cout, ho, wo)


# ----------------------------------------------------------------------------
# Un-fused NumPy reference of the PyTorch module (direct scatter conv-transpose,
# biases included, textbook complex-BN formulas) used only for the self-check.
# ----------------------------------------------------------------------------
def _reference_decoder(x, params, kernel_size, stride, padding):
    x = np.asarray(x, np.float64)
    n, c2, h, w = x.shape
    cin = c2 // 2
    kh, kw = kernel_size
    sh, sw = stride
    ph, pw = padding
    w_r = np.asarray(params["w_r"], np.float64)
    w_i = np.asarray(params["w_i"], np.float64)
    b_r = np.asarray(params["b_r"], np.float64)
    b_i = np.asarray(params["b_i"], np.float64)
    cout = w_r.shape[1]
    ho = (h - 1) * sh - 2 * ph + kh
    wo = (w - 1) * sw - 2 * pw + kw

    def tconv(z, wt, b):                                   # plain ConvTranspose2d
        o = np.zeros((n, cout, (h - 1) * sh + kh, (w - 1) * sw + kw))
        for nb in range(n):
            for ci in range(cin):
                for co in range(cout):
                    for ih in range(h):
                        for iw in range(w):
                            o[nb, co, ih * sh:ih * sh + kh, iw * sw:iw * sw + kw] += (
                                z[nb, ci, ih, iw] * wt[ci, co])
        o = o[:, :, ph:ph + ho, pw:pw + wo]
        return o + b.reshape(1, cout, 1, 1)

    xr, xi = x[:, :cin], x[:, cin:]
    yr = tconv(xr, w_r, b_r) - tconv(xi, w_i, b_i)
    yi = tconv(xr, w_i, b_i) + tconv(xi, w_r, b_r)

    eps = 1e-5
    mu_r, mu_i = yr.mean(0), yi.mean(0)
    yrc, yic = yr - mu_r, yi - mu_i
    vrr = (yrc ** 2).mean(0) + eps
    vii = (yic ** 2).mean(0) + eps
    vri = (yrc * yic).mean(0)
    tau = vrr + vii
    delta = vrr * vii - vri * vri
    s = np.sqrt(delta)
    t = np.sqrt(tau + 2.0 * s)
    ist = 1.0 / (s * t)
    wrr, wii, wri = (vii + s) * ist, (vrr + s) * ist, -vri * ist
    nr = wrr * yrc + wri * yic
    ni = wri * yrc + wii * yic
    g_rr = np.asarray(params["gamma_rr"], np.float64)
    g_ri = np.asarray(params["gamma_ri"], np.float64)
    g_ii = np.asarray(params["gamma_ii"], np.float64)
    be_r = np.asarray(params["beta_r"], np.float64)
    be_i = np.asarray(params["beta_i"], np.float64)
    zr = g_rr * nr + g_ri * ni + be_r
    zi = g_ri * nr + g_ii * ni + be_i
    z = np.concatenate([zr, zi], axis=1)
    a = float(np.asarray(params["prelu_a"]))
    return np.where(z > 0.0, z, a * z)


if __name__ == "__main__":
    key = jax.random.PRNGKey(0)
    ks = jax.random.split(key, 8)

    N = 2
    in_channel, out_channel = 8, 8          # complex channels: 4 real + 4 imag
    kernel_size, stride, padding = (3, 3), (2, 1), (0, 0)
    H, W = 6, 8
    cin, cout = in_channel // 2, out_channel // 2
    Ho = (H - 1) * stride[0] - 2 * padding[0] + kernel_size[0]   # 13
    Wo = (W - 1) * stride[1] - 2 * padding[1] + kernel_size[1]   # 10
    chw = (cout, Ho, Wo)                    # ComplexBatchNormal(chw[0], chw[1], chw[2])

    x = jax.random.normal(ks[0], (N, in_channel, H, W), jnp.float32)
    params = {
        # ComplexConvTranspose2d: two ConvTranspose2d(Cin, Cout, k, s, p) sub-convs
        "w_r": 0.1 * jax.random.normal(ks[1], (cin, cout) + kernel_size, jnp.float32),
        "w_i": 0.1 * jax.random.normal(ks[2], (cin, cout) + kernel_size, jnp.float32),
        # biases exist in the module but are cancelled by training-mode BN
        # centering (reference keeps them; kernel provably drops them).
        "b_r": 0.1 * jax.random.normal(ks[3], (cout,), jnp.float32),
        "b_i": 0.1 * jax.random.normal(ks[4], (cout,), jnp.float32),
        # ComplexBatchNormal params, per (C, H, W)
        "gamma_rr": jnp.full(chw, 1.0 / math.sqrt(2.0), jnp.float32),
        "gamma_ii": jnp.full(chw, 1.0 / math.sqrt(2.0), jnp.float32),
        "gamma_ri": jnp.zeros(chw, jnp.float32),
        "beta_r": 0.01 * jax.random.normal(ks[5], chw, jnp.float32),
        "beta_i": 0.01 * jax.random.normal(ks[6], chw, jnp.float32),
        # nn.PReLU() default single parameter
        "prelu_a": jnp.array(0.25, jnp.float32),
    }

    out = decoder_forward(x, params, kernel_size, stride, padding)
    out = jax.block_until_ready(out)
    assert out.shape == (N, out_channel, Ho, Wo), out.shape
    assert bool(jnp.all(jnp.isfinite(out)))

    ref = _reference_decoder(np.asarray(x), params, kernel_size, stride, padding)
    np.testing.assert_allclose(np.asarray(out), ref, rtol=5e-3, atol=5e-3)
    print("KERNEL_OK")
</pallas_src>

<mosaic_0001>
module attributes {stable_mosaic.version = 11 : i64} {
  func.func @_decoder_kernel(%arg0: i32, %arg1: memref<2x72x130xf32, #tpu.memory_space<vmem>>, %arg2: memref<8x72xf32, #tpu.memory_space<vmem>>, %arg3: memref<4x130xf32, #tpu.memory_space<vmem>>, %arg4: memref<4x130xf32, #tpu.memory_space<vmem>>, %arg5: memref<4x130xf32, #tpu.memory_space<vmem>>, %arg6: memref<4x130xf32, #tpu.memory_space<vmem>>, %arg7: memref<4x130xf32, #tpu.memory_space<vmem>>, %arg8: memref<1x1xf32, #tpu.memory_space<smem>>, %arg9: memref<2x8x130xf32, #tpu.memory_space<vmem>>) attributes {dimension_semantics = [#tpu.dimension_semantics<parallel>], iteration_bounds = array<i64: 1>, scalar_prefetch = 0 : i64, scratch_operands = 0 : i64, tpu.core_type = #tpu.core_type<tc>, window_params = [{transform_indices = @transform_0, window_bounds = array<i64: 2, 72, 130>}, {pipeline_mode = #tpu.pipeline_mode<synchronous>, transform_indices = @transform_1, window_bounds = array<i64: 8, 72>}, {transform_indices = @transform_2, window_bounds = array<i64: 4, 130>}, {transform_indices = @transform_3, window_bounds = array<i64: 4, 130>}, {transform_indices = @transform_4, window_bounds = array<i64: 4, 130>}, {transform_indices = @transform_5, window_bounds = array<i64: 4, 130>}, {transform_indices = @transform_6, window_bounds = array<i64: 4, 130>}, {transform_indices = @transform_7, window_bounds = array<i64: 1, 1>}, {transform_indices = @transform_8, window_bounds = array<i64: 2, 8, 130>}]} {
    %c0 = arith.constant 0 : index
    %c0_0 = arith.constant 0 : index
    %0 = vector.load %arg2[%c0, %c0_0] : memref<8x72xf32, #tpu.memory_space<vmem>>, vector<8x72xf32>
    %c0_1 = arith.constant 0 : index
    %c0_2 = arith.constant 0 : index
    %1 = memref.load %arg8[%c0_1, %c0_2] : memref<1x1xf32, #tpu.memory_space<smem>>
    %c0_3 = arith.constant 0 : index
    %c0_4 = arith.constant 0 : index
    %c0_5 = arith.constant 0 : index
    %2 = vector.load %arg1[%c0_3, %c0_4, %c0_5] : memref<2x72x130xf32, #tpu.memory_space<vmem>>, vector<1x72x130xf32>
    %3 = vector.shape_cast %2 : vector<1x72x130xf32> to vector<72x130xf32>
    %cst = arith.constant dense<0.000000e+00> : vector<8x130xf32>
    %4 = tpu.matmul %0, %3, %cst {dimension_numbers = #tpu.dot_dimension_numbers<[1], [0], [0], [1], [0, 0, 1, 1], [], []>} : vector<8x72xf32>, vector<72x130xf32>, vector<8x130xf32> -> vector<8x130xf32>
    %5 = vector.extract_strided_slice %4 {offsets = [0, 0], sizes = [4, 130], strides = [1, 1]} : vector<8x130xf32> to vector<4x130xf32>
    %6 = vector.extract_strided_slice %4 {offsets = [4, 0], sizes = [4, 130], strides = [1, 1]} : vector<8x130xf32> to vector<4x130xf32>
    %7 = arith.mulf %5, %5 : vector<4x130xf32>
    %8 = arith.mulf %6, %6 : vector<4x130xf32>
    %9 = arith.mulf %5, %6 : vector<4x130xf32>
    %c1 = arith.constant 1 : index
    %c0_6 = arith.constant 0 : index
    %c0_7 = arith.constant 0 : index
    %10 = vector.load %arg1[%c1, %c0_6, %c0_7] : memref<2x72x130xf32, #tpu.memory_space<vmem>>, vector<1x72x130xf32>
    %11 = vector.shape_cast %10 : vector<1x72x130xf32> to vector<72x130xf32>
    %cst_8 = arith.constant dense<0.000000e+00> : vector<8x130xf32>
    %12 = tpu.matmul %0, %11, %cst_8 {dimension_numbers = #tpu.dot_dimension_numbers<[1], [0], [0], [1], [0, 0, 1, 1], [], []>} : vector<8x72xf32>, vector<72x130xf32>, vector<8x130xf32> -> vector<8x130xf32>
    %13 = vector.extract_strided_slice %12 {offsets = [0, 0], sizes = [4, 130], strides = [1, 1]} : vector<8x130xf32> to vector<4x130xf32>
    %14 = vector.extract_strided_slice %12 {offsets = [4, 0], sizes = [4, 130], strides = [1, 1]} : vector<8x130xf32> to vector<4x130xf32>
    %15 = arith.addf %5, %13 : vector<4x130xf32>
    %16 = arith.addf %6, %14 : vector<4x130xf32>
    %17 = arith.mulf %13, %13 : vector<4x130xf32>
    %18 = arith.addf %7, %17 : vector<4x130xf32>
    %19 = arith.mulf %14, %14 : vector<4x130xf32>
    %20 = arith.addf %8, %19 : vector<4x130xf32>
    %21 = arith.mulf %13, %14 : vector<4x130xf32>
    %22 = arith.addf %9, %21 : vector<4x130xf32>
    %cst_9 = arith.constant 5.000000e-01 : f32
    %23 = vector.broadcast %cst_9 : f32 to vector<4x130xf32>
    %24 = arith.mulf %15, %23 : vector<4x130xf32>
    %cst_10 = arith.constant 5.000000e-01 : f32
    %25 = vector.broadcast %cst_10 : f32 to vector<4x130xf32>
    %26 = arith.mulf %16, %25 : vector<4x130xf32>
    %cst_11 = arith.constant 5.000000e-01 : f32
    %27 = vector.broadcast %cst_11 : f32 to vector<4x130xf32>
    %28 = arith.mulf %18, %27 : vector<4x130xf32>
    %29 = arith.mulf %24, %24 : vector<4x130xf32>
    %30 = arith.subf %28, %29 : vector<4x130xf32>
    %cst_12 = arith.constant 9.99999974E-6 : f32
    %31 = vector.broadcast %cst_12 : f32 to vector<4x130xf32>
    %32 = arith.addf %30, %31 : vector<4x130xf32>
    %cst_13 = arith.constant 5.000000e-01 : f32
    %33 = vector.broadcast %cst_13 : f32 to vector<4x130xf32>
    %34 = arith.mulf %20, %33 : vector<4x130xf32>
    %35 = arith.mulf %26, %26 : vector<4x130xf32>
    %36 = arith.subf %34, %35 : vector<4x130xf32>
    %cst_14 = arith.constant 9.99999974E-6 : f32
    %37 = vector.broadcast %cst_14 : f32 to vector<4x130xf32>
    %38 = arith.addf %36, %37 : vector<4x130xf32>
    %cst_15 = arith.constant 5.000000e-01 : f32
    %39 = vector.broadcast %cst_15 : f32 to vector<4x130xf32>
    %40 = arith.mulf %22, %39 : vector<4x130xf32>
    %41 = arith.mulf %24, %26 : vector<4x130xf32>
    %42 = arith.subf %40, %41 : vector<4x130xf32>
    %43 = arith.addf %32, %38 : vector<4x130xf32>
    %44 = arith.mulf %32, %38 : vector<4x130xf32>
    %45 = arith.mulf %42, %42 : vector<4x130xf32>
    %46 = arith.subf %44, %45 : vector<4x130xf32>
    %47 = math.sqrt %46 : vector<4x130xf32>
    %cst_16 = arith.constant 2.000000e+00 : f32
    %48 = vector.broadcast %cst_16 : f32 to vector<4x130xf32>
    %49 = arith.mulf %48, %47 : vector<4x130xf32>
    %50 = arith.addf %43, %49 : vector<4x130xf32>
    %51 = arith.mulf %46, %50 : vector<4x130xf32>
    %52 = math.rsqrt %51 : vector<4x130xf32>
    %53 = arith.addf %38, %47 : vector<4x130xf32>
    %54 = arith.mulf %53, %52 : vector<4x130xf32>
    %55 = arith.addf %32, %47 : vector<4x130xf32>
    %56 = arith.mulf %55, %52 : vector<4x130xf32>
    %cst_17 = arith.constant 0.000000e+00 : f32
    %57 = vector.broadcast %cst_17 : f32 to vector<4x130xf32>
    %58 = arith.subf %57, %42 : vector<4x130xf32>
    %59 = arith.mulf %58, %52 : vector<4x130xf32>
    %c0_18 = arith.constant 0 : index
    %c0_19 = arith.constant 0 : index
    %60 = vector.load %arg3[%c0_18, %c0_19] : memref<4x130xf32, #tpu.memory_space<vmem>>, vector<4x130xf32>
    %c0_20 = arith.constant 0 : index
    %c0_21 = arith.constant 0 : index
    %61 = vector.load %arg4[%c0_20, %c0_21] : memref<4x130xf32, #tpu.memory_space<vmem>>, vector<4x130xf32>
    %c0_22 = arith.constant 0 : index
    %c0_23 = arith.constant 0 : index
    %62 = vector.load %arg5[%c0_22, %c0_23] : memref<4x130xf32, #tpu.memory_space<vmem>>, vector<4x130xf32>
    %63 = arith.mulf %60, %54 : vector<4x130xf32>
    %64 = arith.mulf %61, %59 : vector<4x130xf32>
    %65 = arith.addf %63, %64 : vector<4x130xf32>
    %66 = arith.mulf %60, %59 : vector<4x130xf32>
    %67 = arith.mulf %61, %56 : vector<4x130xf32>
    %68 = arith.addf %66, %67 : vector<4x130xf32>
    %69 = arith.mulf %61, %54 : vector<4x130xf32>
    %70 = arith.mulf %62, %59 : vector<4x130xf32>
    %71 = arith.addf %69, %70 : vector<4x130xf32>
    %72 = arith.mulf %61, %59 : vector<4x130xf32>
    %73 = arith.mulf %62, %56 : vector<4x130xf32>
    %74 = arith.addf %72, %73 : vector<4x130xf32>
    %c0_24 = arith.constant 0 : index
    %c0_25 = arith.constant 0 : index
    %75 = vector.load %arg6[%c0_24, %c0_25] : memref<4x130xf32, #tpu.memory_space<vmem>>, vector<4x130xf32>
    %76 = arith.mulf %65, %24 : vector<4x130xf32>
    %77 = arith.subf %75, %76 : vector<4x130xf32>
    %78 = arith.mulf %68, %26 : vector<4x130xf32>
    %79 = arith.subf %77, %78 : vector<4x130xf32>
    %c0_26 = arith.constant 0 : index
    %c0_27 = arith.constant 0 : index
    %80 = vector.load %arg7[%c0_26, %c0_27] : memref<4x130xf32, #tpu.memory_space<vmem>>, vector<4x130xf32>
    %81 = arith.mulf %71, %24 : vector<4x130xf32>
    %82 = arith.subf %80, %81 : vector<4x130xf32>
    %83 = arith.mulf %74, %26 : vector<4x130xf32>
    %84 = arith.subf %82, %83 : vector<4x130xf32>
    %85 = arith.mulf %65, %5 : vector<4x130xf32>
    %86 = arith.mulf %68, %6 : vector<4x130xf32>
    %87 = arith.addf %85, %86 : vector<4x130xf32>
    %88 = arith.addf %87, %79 : vector<4x130xf32>
    %89 = arith.mulf %71, %5 : vector<4x130xf32>
    %90 = arith.mulf %74, %6 : vector<4x130xf32>
    %91 = arith.addf %89, %90 : vector<4x130xf32>
    %92 = arith.addf %91, %84 : vector<4x130xf32>
    %cst_28 = arith.constant 0.000000e+00 : f32
    %93 = vector.broadcast %cst_28 : f32 to vector<4x130xf32>
    %94 = arith.cmpf ogt, %88, %93 : vector<4x130xf32>
    %95 = vector.broadcast %1 : f32 to vector<4x130xf32>
    %96 = arith.mulf %95, %88 : vector<4x130xf32>
    %97 = arith.select %94, %88, %96 : vector<4x130xi1>, vector<4x130xf32>
    %c0_29 = arith.constant 0 : index
    %c0_30 = arith.constant 0 : index
    %c0_31 = arith.constant 0 : index
    %98 = vector.load %arg9[%c0_29, %c0_30, %c0_31] : memref<2x8x130xf32, #tpu.memory_space<vmem>>, vector<1x4x130xf32>
    %99 = vector.shape_cast %98 : vector<1x4x130xf32> to vector<4x130xf32>
    %100 = vector.shape_cast %97 : vector<4x130xf32> to vector<1x4x130xf32>
    tpu.vector_store %arg9[%c0_29, %c0_30, %c0_31], %100 {strides = array<i32>} : memref<2x8x130xf32, #tpu.memory_space<vmem>>, vector<1x4x130xf32>,
    %cst_32 = arith.constant 0.000000e+00 : f32
    %101 = vector.broadcast %cst_32 : f32 to vector<4x130xf32>
    %102 = arith.cmpf ogt, %92, %101 : vector<4x130xf32>
    %103 = vector.broadcast %1 : f32 to vector<4x130xf32>
    %104 = arith.mulf %103, %92 : vector<4x130xf32>
    %105 = arith.select %102, %92, %104 : vector<4x130xi1>, vector<4x130xf32>
    %c0_33 = arith.constant 0 : index
    %c4 = arith.constant 4 : index
    %c0_34 = arith.constant 0 : index
    %106 = vector.load %arg9[%c0_33, %c4, %c0_34] : memref<2x8x130xf32, #tpu.memory_space<vmem>>, vector<1x4x130xf32>
    %107 = vector.shape_cast %106 : vector<1x4x130xf32> to vector<4x130xf32>
    %108 = vector.shape_cast %105 : vector<4x130xf32> to vector<1x4x130xf32>
    tpu.vector_store %arg9[%c0_33, %c4, %c0_34], %108 {strides = array<i32>} : memref<2x8x130xf32, #tpu.memory_space<vmem>>, vector<1x4x130xf32>,
    %109 = arith.mulf %65, %13 : vector<4x130xf32>
    %110 = arith.mulf %68, %14 : vector<4x130xf32>
    %111 = arith.addf %109, %110 : vector<4x130xf32>
    %112 = arith.addf %111, %79 : vector<4x130xf32>
    %113 = arith.mulf %71, %13 : vector<4x130xf32>
    %114 = arith.mulf %74, %14 : vector<4x130xf32>
    %115 = arith.addf %113, %114 : vector<4x130xf32>
    %116 = arith.addf %115, %84 : vector<4x130xf32>
    %cst_35 = arith.constant 0.000000e+00 : f32
    %117 = vector.broadcast %cst_35 : f32 to vector<4x130xf32>
    %118 = arith.cmpf ogt, %112, %117 : vector<4x130xf32>
    %119 = vector.broadcast %1 : f32 to vector<4x130xf32>
    %120 = arith.mulf %119, %112 : vector<4x130xf32>
    %121 = arith.select %118, %112, %120 : vector<4x130xi1>, vector<4x130xf32>
    %c1_36 = arith.constant 1 : index
    %c0_37 = arith.constant 0 : index
    %c0_38 = arith.constant 0 : index
    %122 = vector.load %arg9[%c1_36, %c0_37, %c0_38] : memref<2x8x130xf32, #tpu.memory_space<vmem>>, vector<1x4x130xf32>
    %123 = vector.shape_cast %122 : vector<1x4x130xf32> to vector<4x130xf32>
    %124 = vector.shape_cast %121 : vector<4x130xf32> to vector<1x4x130xf32>
    tpu.vector_store %arg9[%c1_36, %c0_37, %c0_38], %124 {strides = array<i32>} : memref<2x8x130xf32, #tpu.memory_space<vmem>>, vector<1x4x130xf32>,
    %cst_39 = arith.constant 0.000000e+00 : f32
    %125 = vector.broadcast %cst_39 : f32 to vector<4x130xf32>
    %126 = arith.cmpf ogt, %116, %125 : vector<4x130xf32>
    %127 = vector.broadcast %1 : f32 to vector<4x130xf32>
    %128 = arith.mulf %127, %116 : vector<4x130xf32>
    %129 = arith.select %126, %116, %128 : vector<4x130xi1>, vector<4x130xf32>
    %c1_40 = arith.constant 1 : index
    %c4_41 = arith.constant 4 : index
    %c0_42 = arith.constant 0 : index
    %130 = vector.load %arg9[%c1_40, %c4_41, %c0_42] : memref<2x8x130xf32, #tpu.memory_space<vmem>>, vector<1x4x130xf32>
    %131 = vector.shape_cast %130 : vector<1x4x130xf32> to vector<4x130xf32>
    %132 = vector.shape_cast %129 : vector<4x130xf32> to vector<1x4x130xf32>
    tpu.vector_store %arg9[%c1_40, %c4_41, %c0_42], %132 {strides = array<i32>} : memref<2x8x130xf32, #tpu.memory_space<vmem>>, vector<1x4x130xf32>,
    return
  }
  func.func @transform_0(%arg0: i32) -> (i32, i32, i32) {
    %c0_i32 = arith.constant 0 : i32
    %c0_i32_0 = arith.constant 0 : i32
    %c0_i32_1 = arith.constant 0 : i32
    return %c0_i32, %c0_i32_0, %arg0 : i32, i32, i32
  }
  func.func @transform_1(%arg0: i32) -> (i32, i32) {
    %c0_i32 = arith.constant 0 : i32
    %c0_i32_0 = arith.constant 0 : i32
    %c0_i32_1 = arith.constant 0 : i32
    return %c0_i32, %c0_i32_0 : i32, i32
  }
  func.func @transform_2(%arg0: i32) -> (i32, i32) {
    %c0_i32 = arith.constant 0 : i32
    %c0_i32_0 = arith.constant 0 : i32
    return %c0_i32, %arg0 : i32, i32
  }
  func.func @transform_3(%arg0: i32) -> (i32, i32) {
    %c0_i32 = arith.constant 0 : i32
    %c0_i32_0 = arith.constant 0 : i32
    return %c0_i32, %arg0 : i32, i32
  }
  func.func @transform_4(%arg0: i32) -> (i32, i32) {
    %c0_i32 = arith.constant 0 : i32
    %c0_i32_0 = arith.constant 0 : i32
    return %c0_i32, %arg0 : i32, i32
  }
  func.func @transform_5(%arg0: i32) -> (i32, i32) {
    %c0_i32 = arith.constant 0 : i32
    %c0_i32_0 = arith.constant 0 : i32
    return %c0_i32, %arg0 : i32, i32
  }
  func.func @transform_6(%arg0: i32) -> (i32, i32) {
    %c0_i32 = arith.constant 0 : i32
    %c0_i32_0 = arith.constant 0 : i32
    return %c0_i32, %arg0 : i32, i32
  }
  func.func @transform_7(%arg0: i32) -> (i32, i32) {
    %c0_i32 = arith.constant 0 : i32
    %c0_i32_0 = arith.constant 0 : i32
    %c0_i32_1 = arith.constant 0 : i32
    return %c0_i32, %c0_i32_0 : i32, i32
  }
  func.func @transform_8(%arg0: i32) -> (i32, i32, i32) {
    %c0_i32 = arith.constant 0 : i32
    %c0_i32_0 = arith.constant 0 : i32
    %c0_i32_1 = arith.constant 0 : i32
    return %c0_i32, %c0_i32_0, %arg0 : i32, i32, i32
  }
}

</mosaic_0001>

<llo_original>
// kernel: tpu_custom_call.1
$region0: #{tpu_custom_call.1}
  #allocation0 [shape = 'u32[]', space=smem, size = 0x4, offset = 0x4, fixed_abs, tag = 'smem constant byte address 0x4 - core index']
  #allocation1 [shape = 'u32[144,128]{1,0:T(1,128)}', space=vmem, size = 0x12000, scoped, tag = 'internal scratch']
  #allocation2 [shape = 'f32[1,1]{1,0:T(1,128)S(6)}', space=smem, size = 0x200, scoped, tag = 'scoped memory for tpu_custom_call.1']
  %s0 = inlined_call_operand.vmem [shape: f32[2,72,130], index: 0, kind: input, shape index: {}]
  %s1 = inlined_call_operand.vmem [shape: f32[8,72], index: 1, kind: input, shape index: {}]
  %s2 = inlined_call_operand.vmem [shape: f32[4,130], index: 2, kind: input, shape index: {}]
  %s3 = inlined_call_operand.vmem [shape: f32[4,130], index: 3, kind: input, shape index: {}]
  %s4 = inlined_call_operand.vmem [shape: f32[4,130], index: 4, kind: input, shape index: {}]
  %s5 = inlined_call_operand.vmem [shape: f32[4,130], index: 5, kind: input, shape index: {}]
  %s6 = inlined_call_operand.vmem [shape: f32[4,130], index: 6, kind: input, shape index: {}]
  %s7 = inlined_call_operand.<no memory space> [shape: f32[1,1], index: 7, kind: input, shape index: {}]
  %s8 = inlined_call_operand.hbm [shape: f32[2,8,130], index: 8, kind: output, shape index: {}]
  %s9 = sld [smem:[#allocation0]]
  $region42: #{tpu_custom_call.1} parent=0
    _
  %s11 = ssub.s32 1, %s9
  %s12 = scalar_select 0, %s11, %s9
  %13 = sst [smem:[#allocation2]] %s7
  $region1: #{tpu_custom_call.1} parent=0
    #allocation3 [shape = 'u8[16384]{0}', space=vmem, size = 0x4000, scoped, tag = 'output window, operand 0, single buffered']
    #allocation4 [shape = 's32[1]{0}', space=sflag, size = 0x4, scoped, tag = 'scoped memory for tpu_custom_call.1']
    %14 = vsyncpa [#allocation4], 0
    // Predicated region
    $region2: #{tpu_custom_call.1} parent=1 // pred_check
      _
    $region3: #{tpu_custom_call.1} parent=1 // pred_check_branch
      %16 = sbr.rel (0) target = $region5
    $region4: #{tpu_custom_call.1} parent=1 // pred_region
      _
    $region5: #{tpu_custom_call.1} parent=1 // pred_fallthru
      _
    // Predicated region
    $region6: #{tpu_custom_call.1} parent=1 // pred_check
      _
    $region7: #{tpu_custom_call.1} parent=1 // pred_check_branch
      %18 = sbr.rel (0) target = $region9
    $region8: #{tpu_custom_call.1} parent=1 // pred_region
      _
    $region9: #{tpu_custom_call.1} parent=1 // pred_fallthru
      _
    // Predicated region
    $region10: #{tpu_custom_call.1} parent=1 // pred_check
      _
    $region11: #{tpu_custom_call.1} parent=1 // pred_check_branch
      %20 = sbr.rel (0) target = $region13
    $region12: #{tpu_custom_call.1} parent=1 // pred_region
      _
    $region13: #{tpu_custom_call.1} parent=1 // pred_fallthru
      _
    // Predicated region
    $region14: #{tpu_custom_call.1} parent=1 // pred_check
      _
    $region15: #{tpu_custom_call.1} parent=1 // pred_check_branch
      %22 = sbr.rel (0) target = $region17
    $region16: #{tpu_custom_call.1} parent=1 // pred_region
      _
    $region17: #{tpu_custom_call.1} parent=1 // pred_fallthru
      _
    // Predicated region
    $region18: #{tpu_custom_call.1} parent=1 // pred_check
      _
    $region19: #{tpu_custom_call.1} parent=1 // pred_check_branch
      %24 = sbr.rel (0) target = $region21
    $region20: #{tpu_custom_call.1} parent=1 // pred_region
      _
    $region21: #{tpu_custom_call.1} parent=1 // pred_fallthru
      _
    // Predicated region
    $region22: #{tpu_custom_call.1} parent=1 // pred_check
      _
    $region23: #{tpu_custom_call.1} parent=1 // pred_check_branch
      %26 = sbr.rel (0) target = $region25
    $region24: #{tpu_custom_call.1} parent=1 // pred_region
      _
    $region25: #{tpu_custom_call.1} parent=1 // pred_fallthru
      _
    // Predicated region
    $region26: #{tpu_custom_call.1} parent=1 // pred_check
      _
    $region27: #{tpu_custom_call.1} parent=1 // pred_check_branch
      %28 = sbr.rel (0) target = $region29
    $region28: #{tpu_custom_call.1} parent=1 // pred_region
      _
    $region29: #{tpu_custom_call.1} parent=1 // pred_fallthru
      _
    // Predicated region
    $region30: #{tpu_custom_call.1} parent=1 // pred_check
      _
    $region31: #{tpu_custom_call.1} parent=1 // pred_check_branch
      %30 = sbr.rel (0) target = $region33
    $region32: #{tpu_custom_call.1} parent=1 // pred_region
      _
    $region33: #{tpu_custom_call.1} parent=1 // pred_fallthru
      _
    %v31 = vld [vmem:[%s1] sm:$0xff]
    %s32 = sld [smem:[#allocation2]]
    %v33 = vld [vmem:[%s0] sm:$0xff]
    %v34 = vld [vmem:[%s0 + $0x8] sm:$0xff]
    %v35 = vld [vmem:[%s0 + $0x10] sm:$0xff]
    %v36 = vld [vmem:[%s0 + $0x18] sm:$0xff]
    %v37 = vld [vmem:[%s0 + $0x20] sm:$0xff]
    %v38 = vld [vmem:[%s0 + $0x28] sm:$0xff]
    %v39 = vld [vmem:[%s0 + $0x30] sm:$0xff]
    %v40 = vld [vmem:[%s0 + $0x38] sm:$0xff]
    %v41 = vld [vmem:[%s0 + $0x40] sm:$0xff]
    %v42 = vld [vmem:[%s0 + $0x48] sm:$0xff]
    %v43 = vld [vmem:[%s0 + $0x50] sm:$0xff]
    %v44 = vld [vmem:[%s0 + $0x58] sm:$0xff]
    %v45 = vld [vmem:[%s0 + $0x60] sm:$0xff]
    %v46 = vld [vmem:[%s0 + $0x68] sm:$0xff]
    %v47 = vld [vmem:[%s0 + $0x70] sm:$0xff]
    %v48 = vld [vmem:[%s0 + $0x78] sm:$0xff]
    %v49 = vld [vmem:[%s0 + $0x80] sm:$0xff]
    %v50 = vld [vmem:[%s0 + $0x88] sm:$0xff]
    %vm51 = vcmask 588800
    %v53 = vsel %vm51, %v31, 0
    %55 = vmatprep.subr.mxu0 0.0
    %56 = vmatpush1.msra.mxu0 0.0
    %57 = vmatprep.subr.mxu0 0.0
    %58 = vmatpush1.msra.mxu0 0.0
    %59 = vmatprep.subr.mxu0 0.0
    %60 = vmatpush1.msra.mxu0 0.0
    %61 = vmatprep.subr.mxu0 0.0
    %62 = vmatpush1.msra.mxu0 0.0
    %63 = vmatprep.subr.mxu0 0.0
    %64 = vmatpush1.msra.mxu0 0.0
    %65 = vmatprep.subr.mxu0 0.0
    %66 = vmatpush1.msra.mxu0 0.0
    %67 = vmatprep.subr.mxu0 0.0
    %68 = vmatpush1.msra.mxu0 0.0
    %69 = vmatprep.subr.mxu0 %v50
    %70 = vmatpush1.msra.mxu0 %v49
    %71 = vmatprep.subr.mxu0 %v48
    %72 = vmatpush1.msra.mxu0 %v47
    %73 = vmatprep.subr.mxu0 %v46
    %74 = vmatpush1.msra.mxu0 %v45
    %75 = vmatprep.subr.mxu0 %v44
    %76 = vmatpush1.msra.mxu0 %v43
    %77 = vmatprep.subr.mxu0 %v42
    %78 = vmatpush1.msra.mxu0 %v41
    %79 = vmatprep.subr.mxu0 %v40
    %80 = vmatpush1.msra.mxu0 %v39
    %81 = vmatprep.subr.mxu0 %v38
    %82 = vmatpush1.msra.mxu0 %v37
    %83 = vmatprep.subr.mxu0 %v36
    %84 = vmatpush1.msra.mxu0 %v35
    %85 = vmatprep.subr.mxu0 %v34
    %86 = vmatpush1.msra.mxu0 %v33
    %87 = vmatprep.subr.mxu0 0.0
    %88 = vmatpush2.msra.mxu0 0.0
    %89 = vmatprep.subr.mxu0 0.0
    %90 = vmatpush2.msra.mxu0 0.0
    %91 = vmatprep.subr.mxu0 0.0
    %92 = vmatpush2.msra.mxu0 0.0
    %93 = vmatprep.subr.mxu0 0.0
    %94 = vmatpush2.msra.mxu0 0.0
    %95 = vmatprep.subr.mxu0 0.0
    %96 = vmatpush2.msra.mxu0 0.0
    %97 = vmatprep.subr.mxu0 0.0
    %98 = vmatpush2.msra.mxu0 0.0
    %99 = vmatprep.subr.mxu0 0.0
    %100 = vmatpush2.msra.mxu0 0.0
    %101 = vmatprep.subr.mxu0 0.0
    %102 = vmatpush2.msra.mxu0 0.0
    %103 = vmatprep.subr.mxu0 0.0
    %104 = vmatpush2.msra.mxu0 0.0
    %105 = vmatprep.subr.mxu0 0.0
    %106 = vmatpush2.msra.mxu0 0.0
    %107 = vmatprep.subr.mxu0 0.0
    %108 = vmatpush2.msra.mxu0 0.0
    %109 = vmatprep.subr.mxu0 0.0
    %110 = vmatpush2.msra.mxu0 0.0
    %111 = vmatprep.subr.mxu0 0.0
    %112 = vmatpush2.msra.mxu0 0.0
    %113 = vmatprep.subr.mxu0 0.0
    %114 = vmatpush2.msra.mxu0 0.0
    %115 = vmatprep.subr.mxu0 0.0
    %116 = vmatpush2.msra.mxu0 0.0
    %117 = vmatprep.subr.mxu0 0.0
    %118 = vmatpush2.msra.mxu0 0.0
    %119 = vmatprep.mubr.f32.mxu0 0.0
    %120 = vmatmul.mubr.f32.gmra.mxu0 %v53
    %v121 = vpop.f32.mrf.mxu0
    %v122 = vadd.f32 0.0, %v121
    %v123 = vpop.f32.mrf.mxu0
    %v124 = vadd.f32 0.0, %v123
    %125 = vdwg.mxu0
    %v126 = vmul.f32 %v122, %v122
    %v127 = vmul.f32 %v124, %v124
    %v130 = vrot.slane %v122, 4
    %v131 = vrot.slane %v124, 4
    %v134 = vmul.f32 %v122, %v130
    %v135 = vmul.f32 %v124, %v131
    %s136 = scalar_lea.vmem %s0, 144
    %v137 = vld [vmem:[%s136] sm:$0xff]
    %v138 = vld [vmem:[%s136 + $0x8] sm:$0xff]
    %v139 = vld [vmem:[%s136 + $0x10] sm:$0xff]
    %v140 = vld [vmem:[%s136 + $0x18] sm:$0xff]
    %v141 = vld [vmem:[%s136 + $0x20] sm:$0xff]
    %v142 = vld [vmem:[%s136 + $0x28] sm:$0xff]
    %v143 = vld [vmem:[%s136 + $0x30] sm:$0xff]
    %v144 = vld [vmem:[%s136 + $0x38] sm:$0xff]
    %v145 = vld [vmem:[%s136 + $0x40] sm:$0xff]
    %v146 = vld [vmem:[%s136 + $0x48] sm:$0xff]
    %v147 = vld [vmem:[%s136 + $0x50] sm:$0xff]
    %v148 = vld [vmem:[%s136 + $0x58] sm:$0xff]
    %v149 = vld [vmem:[%s136 + $0x60] sm:$0xff]
    %v150 = vld [vmem:[%s136 + $0x68] sm:$0xff]
    %v151 = vld [vmem:[%s136 + $0x70] sm:$0xff]
    %v152 = vld [vmem:[%s136 + $0x78] sm:$0xff]
    %v153 = vld [vmem:[%s136 + $0x80] sm:$0xff]
    %v154 = vld [vmem:[%s136 + $0x88] sm:$0xff]
    %155 = vmatprep.subr.mxu0 0.0
    %156 = vmatpush1.msra.mxu0 0.0
    %157 = vmatprep.subr.mxu0 0.0
    %158 = vmatpush1.msra.mxu0 0.0
    %159 = vmatprep.subr.mxu0 0.0
    %160 = vmatpush1.msra.mxu0 0.0
    %161 = vmatprep.subr.mxu0 0.0
    %162 = vmatpush1.msra.mxu0 0.0
    %163 = vmatprep.subr.mxu0 0.0
    %164 = vmatpush1.msra.mxu0 0.0
    %165 = vmatprep.subr.mxu0 0.0
    %166 = vmatpush1.msra.mxu0 0.0
    %167 = vmatprep.subr.mxu0 0.0
    %168 = vmatpush1.msra.mxu0 0.0
    %169 = vmatprep.subr.mxu0 %v154
    %170 = vmatpush1.msra.mxu0 %v153
    %171 = vmatprep.subr.mxu0 %v152
    %172 = vmatpush1.msra.mxu0 %v151
    %173 = vmatprep.subr.mxu0 %v150
    %174 = vmatpush1.msra.mxu0 %v149
    %175 = vmatprep.subr.mxu0 %v148
    %176 = vmatpush1.msra.mxu0 %v147
    %177 = vmatprep.subr.mxu0 %v146
    %178 = vmatpush1.msra.mxu0 %v145
    %179 = vmatprep.subr.mxu0 %v144
    %180 = vmatpush1.msra.mxu0 %v143
    %181 = vmatprep.subr.mxu0 %v142
    %182 = vmatpush1.msra.mxu0 %v141
    %183 = vmatprep.subr.mxu0 %v140
    %184 = vmatpush1.msra.mxu0 %v139
    %185 = vmatprep.subr.mxu0 %v138
    %186 = vmatpush1.msra.mxu0 %v137
    %187 = vmatprep.subr.mxu0 0.0
    %188 = vmatpush2.msra.mxu0 0.0
    %189 = vmatprep.subr.mxu0 0.0
    %190 = vmatpush2.msra.mxu0 0.0
    %191 = vmatprep.subr.mxu0 0.0
    %192 = vmatpush2.msra.mxu0 0.0
    %193 = vmatprep.subr.mxu0 0.0
    %194 = vmatpush2.msra.mxu0 0.0
    %195 = vmatprep.subr.mxu0 0.0
    %196 = vmatpush2.msra.mxu0 0.0
    %197 = vmatprep.subr.mxu0 0.0
    %198 = vmatpush2.msra.mxu0 0.0
    %199 = vmatprep.subr.mxu0 0.0
    %200 = vmatpush2.msra.mxu0 0.0
    %201 = vmatprep.subr.mxu0 0.0
    %202 = vmatpush2.msra.mxu0 0.0
    %203 = vmatprep.subr.mxu0 0.0
    %204 = vmatpush2.msra.mxu0 0.0
    %205 = vmatprep.subr.mxu0 0.0
    %206 = vmatpush2.msra.mxu0 0.0
    %207 = vmatprep.subr.mxu0 0.0
    %208 = vmatpush2.msra.mxu0 0.0
    %209 = vmatprep.subr.mxu0 0.0
    %210 = vmatpush2.msra.mxu0 0.0
    %211 = vmatprep.subr.mxu0 0.0
    %212 = vmatpush2.msra.mxu0 0.0
    %213 = vmatprep.subr.mxu0 0.0
    %214 = vmatpush2.msra.mxu0 0.0
    %215 = vmatprep.subr.mxu0 0.0
    %216 = vmatpush2.msra.mxu0 0.0
    %217 = vmatprep.subr.mxu0 0.0
    %218 = vmatpush2.msra.mxu0 0.0
    %219 = vmatprep.mubr.f32.mxu0 0.0
    %220 = vmatmul.mubr.f32.gmra.mxu0 %v53
    %v221 = vpop.f32.mrf.mxu0
    %v222 = vadd.f32 0.0, %v221
    %v223 = vpop.f32.mrf.mxu0
    %v224 = vadd.f32 0.0, %v223
    %225 = vdwg.mxu0
    %v226 = vadd.f32 %v122, %v222
    %v227 = vadd.f32 %v124, %v224
    %v228 = vmul.f32 %v222, %v222
    %v229 = vmul.f32 %v224, %v224
    %v230 = vadd.f32 %v126, %v228
    %v231 = vadd.f32 %v127, %v229
    %v234 = vrot.slane %v222, 4
    %v235 = vrot.slane %v224, 4
    %v238 = vmul.f32 %v222, %v234
    %v239 = vmul.f32 %v224, %v235
    %v240 = vadd.f32 %v134, %v238
    %v241 = vadd.f32 %v135, %v239
    %v242 = vmul.f32 %v226, 0.5
    %v243 = vmul.f32 %v227, 0.5
    %v244 = vmul.f32 %v230, 0.5
    %v245 = vmul.f32 %v231, 0.5
    %v246 = vmul.f32 %v242, %v242
    %v247 = vmul.f32 %v243, %v243
    %v248 = vsub.f32 %v244, %v246
    %v249 = vsub.f32 %v245, %v247
    %v250 = vadd.f32 %v248, 1e-05
    %v251 = vadd.f32 %v249, 1e-05
    %v252 = vmul.f32 %v240, 0.5
    %v253 = vmul.f32 %v241, 0.5
    %v256 = vrot.slane %v242, 4
    %v257 = vrot.slane %v243, 4
    %v260 = vmul.f32 %v242, %v256
    %v261 = vmul.f32 %v243, %v257
    %v262 = vsub.f32 %v252, %v260
    %v263 = vsub.f32 %v253, %v261
    %v266 = vrot.slane %v250, 4
    %v267 = vrot.slane %v251, 4
    %v270 = vadd.f32 %v250, %v266
    %v271 = vadd.f32 %v251, %v267
    %v272 = vmul.f32 %v250, %v266
    %v273 = vmul.f32 %v251, %v267
    %v274 = vmul.f32 %v262, %v262
    %v275 = vmul.f32 %v263, %v263
    %v276 = vsub.f32 %v272, %v274
    %v277 = vsub.f32 %v273, %v275
    %v278 = vrsqrt.pop %v276
    %v279 = vmul.f32 %v276, %v278
    %vm280 = vcmp.eq.f32.partialorder %v276, inf
    %v281 = vsel %vm280, %v276, %v279
    %vm282 = vcmp.eq.f32.partialorder %v276, 0.0
    %v283 = vand.u32 %v276, 2147483648
    %v284 = vsel %vm282, %v283, %v281
    %v285 = vrsqrt.pop %v277
    %v286 = vmul.f32 %v277, %v285
    %vm287 = vcmp.eq.f32.partialorder %v277, inf
    %v288 = vsel %vm287, %v277, %v286
    %vm289 = vcmp.eq.f32.partialorder %v277, 0.0
    %v290 = vand.u32 %v277, 2147483648
    %v291 = vsel %vm289, %v290, %v288
    %v292 = vmul.f32 %v284, 2.0
    %v293 = vmul.f32 %v291, 2.0
    %v294 = vadd.f32 %v270, %v292
    %v295 = vadd.f32 %v271, %v293
    %v296 = vmul.f32 %v276, %v294
    %v297 = vmul.f32 %v277, %v295
    %v298 = vrsqrt.pop %v296
    %v299 = vrsqrt.pop %v297
    %v302 = vrot.slane %v284, 4
    %v303 = vrot.slane %v291, 4
    %v306 = vadd.f32 %v250, %v302
    %v307 = vadd.f32 %v251, %v303
    %v310 = vrot.slane %v298, 4
    %v311 = vrot.slane %v299, 4
    %v314 = vmul.f32 %v306, %v310
    %v315 = vmul.f32 %v307, %v311
    %v316 = vadd.f32 %v250, %v284
    %v317 = vadd.f32 %v251, %v291
    %v318 = vmul.f32 %v316, %v298
    %v319 = vmul.f32 %v317, %v299
    %v320 = vsub.f32 0.0, %v262
    %v321 = vsub.f32 0.0, %v263
    %v322 = vmul.f32 %v320, %v298
    %v323 = vmul.f32 %v321, %v299
    %v324 = vld [vmem:[%s2] sm:$0xff]
    %v325 = vld [vmem:[%s3] sm:$0xff]
    %v326 = vld [vmem:[%s4] sm:$0xff]
    %v329 = vcombine.high %v314, %v315
    %v331 = vmul.f32 %v324, %v329
    %v334 = vcombine.low %v322, %v323
    %v336 = vmul.f32 %v325, %v334
    %v337 = vadd.f32 %v331, %v336
    %v338 = vmul.f32 %v324, %v334
    %v341 = vcombine.low %v318, %v319
    %v343 = vmul.f32 %v325, %v341
    %v344 = vadd.f32 %v338, %v343
    %v345 = vmul.f32 %v325, %v329
    %v346 = vmul.f32 %v326, %v334
    %v347 = vadd.f32 %v345, %v346
    %v348 = vmul.f32 %v326, %v341
    %v349 = vadd.f32 %v336, %v348
    %v350 = vld [vmem:[%s5] sm:$0xff]
    %v351 = vcombine.low %v242, %v243
    %v353 = vmul.f32 %v337, %v351
    %v354 = vsub.f32 %v350, %v353
    %v355 = vcombine.high %v242, %v243
    %v357 = vmul.f32 %v344, %v355
    %v358 = vsub.f32 %v354, %v357
    %v359 = vld [vmem:[%s6] sm:$0xff]
    %v360 = vmul.f32 %v347, %v351
    %v361 = vsub.f32 %v359, %v360
    %v362 = vmul.f32 %v349, %v355
    %v363 = vsub.f32 %v361, %v362
    %v364 = vcombine.low %v122, %v124
    %v366 = vmul.f32 %v337, %v364
    %v367 = vcombine.high %v122, %v124
    %v369 = vmul.f32 %v344, %v367
    %v370 = vadd.f32 %v366, %v369
    %v371 = vadd.f32 %v370, %v358
    %v372 = vmul.f32 %v347, %v364
    %v373 = vmul.f32 %v349, %v367
    %v374 = vadd.f32 %v372, %v373
    %v375 = vadd.f32 %v374, %v363
    %vm376 = vcmp.gt.f32.partialorder %v371, 0.0
    %v377 = vstv %s32
    %v378 = vmul.f32 %v377, %v371
    %v379 = vsel %vm376, %v371, %v378
    %v381 = vcombine.high %v379, %v379
    %383 = vst [vmem:[#allocation3] sm:$0xf] %v379
    %vm384 = vcmask 11264
    %385 = vst.msk [vmem:[#allocation3 + $0x8] sm:$0xf] %vm384, %v381
    %vm386 = vcmp.gt.f32.partialorder %v375, 0.0
    %v387 = vmul.f32 %v377, %v375
    %v388 = vsel %vm386, %v375, %v387
    %v390 = vcombine.low %v388, %v388
    %392 = vst [vmem:[#allocation3] sm:$0xf0] %v390
    %vm393 = vcmask 15364
    %394 = vst.msk [vmem:[#allocation3 + $0x8] sm:$0xf0] %vm393, %v388
    %v395 = vcombine.low %v222, %v224
    %v397 = vmul.f32 %v337, %v395
    %v398 = vcombine.high %v222, %v224
    %v400 = vmul.f32 %v344, %v398
    %v401 = vadd.f32 %v397, %v400
    %v402 = vadd.f32 %v401, %v358
    %v403 = vmul.f32 %v347, %v395
    %v404 = vmul.f32 %v349, %v398
    %v405 = vadd.f32 %v403, %v404
    %v406 = vadd.f32 %v405, %v363
    %vm407 = vcmp.gt.f32.partialorder %v402, 0.0
    %v408 = vmul.f32 %v377, %v402
    %v409 = vsel %vm407, %v402, %v408
    %v411 = vcombine.high %v409, %v409
    %s413 = scalar_lea.vmem [#allocation3], 16
    %414 = vst [vmem:[%s413] sm:$0xf] %v409
    %415 = vst.msk [vmem:[%s413 + $0x8] sm:$0xf] %vm384, %v411
    %vm416 = vcmp.gt.f32.partialorder %v406, 0.0
    %v417 = vmul.f32 %v377, %v406
    %v418 = vsel %vm416, %v406, %v417
    %v420 = vcombine.low %v418, %v418
    %422 = vst [vmem:[%s413] sm:$0xf0] %v420
    %423 = vst.msk [vmem:[%s413 + $0x8] sm:$0xf0] %vm393, %v418
    // Predicated region
    $region34: #{tpu_custom_call.1} parent=1 // pred_check
      _
    $region35: #{tpu_custom_call.1} parent=1 // pred_check_branch
      %425 = sbr.rel (0) target = $region37
    $region36: #{tpu_custom_call.1} parent=1 // pred_region
      %s427 = ssub.s32 512, 512
      %428 = vsyncadd [#allocation4], %s427
      %s429 = sshll.u32 [#allocation3], 4
      %s430 = int_to_ptr.vmem [resolvable:$true] %s429
      %435 = dma.vmem_to_hbm [thread:$0]  %s430, 512, %s8, [#allocation4], 256, 256, 16
    $region37: #{tpu_custom_call.1} parent=1 // pred_fallthru
      _
    // Predicated region
    $region38: #{tpu_custom_call.1} parent=1 // pred_check
      _
    $region39: #{tpu_custom_call.1} parent=1 // pred_check_branch
      %437 = sbr.rel (0) target = $region41
    $region40: #{tpu_custom_call.1} parent=1 // pred_region
      %438 = dma.done [#allocation4], 512
    $region41: #{tpu_custom_call.1} parent=1 // pred_fallthru
      _
    %439 = vsyncpa [#allocation4], 1

</llo_original>
